<compile_context>
chip_gen: v6e
topology: v6e:2x2x1
jax: 0.10.0
libtpu: 0.0.40
codegen_flags: <defaults>
</compile_context>

<pallas_src>
import functools

import jax
import jax.numpy as jnp
from jax.experimental import pallas as pl
from jax.experimental.pallas import tpu as pltpu


def affine_coupling_kernel(x_ref, w1_ref, b1_ref, w2_ref, b2_ref,
                           y_ref, jac_ref, *, ca, cb, compute_dtype):
    x = x_ref[...]                          # (C, hw_tile) f32
    xa = x[:ca]                             # (Ca, hw_tile) identity path
    xb = x[ca:]                             # (Cb, hw_tile)

    # 1x1 conv #1 as channel matmul + bias + ReLU: (hidden, Ca) @ (Ca, HW)
    h = jnp.dot(w1_ref[...], xa.astype(compute_dtype),
                preferred_element_type=jnp.float32) + b1_ref[...]
    h = jnp.maximum(h, 0.0)

    # 1x1 conv #2: merged s/t heads, one (2*Cb, hidden) @ (hidden, HW) matmul.
    out = jnp.dot(w2_ref[...], h.astype(compute_dtype),
                  preferred_element_type=jnp.float32) + b2_ref[...]
    s = jax.nn.sigmoid(out[:cb]) + 0.5      # squash == 'sigmoid', f32 epilogue
    t = out[cb:]

    y_b = s * xb + t
    # Full y tile in one lane-dense store: rows [:Ca] = x_a, rows [Ca:] = y_b.
    y_ref[...] = jnp.concatenate([xa, y_b], axis=0).astype(y_ref.dtype)
    jac_ref[...] = jnp.sum(jnp.log(s), axis=0, keepdims=True).astype(jac_ref.dtype)


def affine_coupling_forward(x, w1, b1, w2, b2, *, hw_tile=None,
                            compute_dtype=jnp.float32):
    """x: (N, C, H, W) float32.  Returns (y, jac) like AffineCoupling.forward."""
    N, C, H, W = x.shape
    Ca = C // 2
    Cb = C - Ca
    HW = H * W
    hidden = w1.shape[0]
    assert w1.shape == (hidden, Ca)
    assert w2.shape == (2 * Cb, hidden)

    if hw_tile is None:
        hw_tile = HW
        # Cap the tile so the (hidden, hw_tile) f32 activation doesn't spill and
        # double-buffered tiles stay small on v7x's 64 MiB VMEM.
        while hw_tile > 1024 and hw_tile % 2 == 0:
            hw_tile //= 2
        # Guarantee >= 2 parallel grid programs (v7x has 2 TensorCores).
        if N * (HW // hw_tile) < 2 and hw_tile % 256 == 0:
            hw_tile //= 2
    assert HW % hw_tile == 0, "H*W must be divisible by hw_tile"
    assert hw_tile % 128 == 0, "hw_tile must be a multiple of 128 (lane-dense tiles)"

    x_flat = x.reshape(N, C, HW)
    w1c = w1.astype(compute_dtype)          # pre-cast once: halves weight DMA for bf16
    w2c = w2.astype(compute_dtype)

    grid = (N, HW // hw_tile)
    kernel = functools.partial(affine_coupling_kernel,
                               ca=Ca, cb=Cb, compute_dtype=compute_dtype)

    y, jac = pl.pallas_call(
        kernel,
        out_shape=(jax.ShapeDtypeStruct((N, C, HW), x.dtype),
                   jax.ShapeDtypeStruct((N, 1, HW), x.dtype)),
        grid_spec=pltpu.PrefetchScalarGridSpec(
            num_scalar_prefetch=0,
            grid=grid,
            in_specs=[
                pl.BlockSpec((None, C, hw_tile), lambda n, j: (n, 0, j)),
                pl.BlockSpec((hidden, Ca), lambda n, j: (0, 0)),
                pl.BlockSpec((hidden, 1), lambda n, j: (0, 0)),
                pl.BlockSpec((2 * Cb, hidden), lambda n, j: (0, 0)),
                pl.BlockSpec((2 * Cb, 1), lambda n, j: (0, 0)),
            ],
            out_specs=[
                pl.BlockSpec((None, C, hw_tile), lambda n, j: (n, 0, j)),
                pl.BlockSpec((None, 1, hw_tile), lambda n, j: (n, 0, j)),
            ],
        ),
        compiler_params=pltpu.CompilerParams(
            dimension_semantics=("parallel", "parallel")),
    )(x_flat, w1c, b1, w2c, b2)

    return y.reshape(N, C, H, W), jac.reshape(N, 1, H, W)


def affine_coupling_reference(x, w1, b1, w2, b2):
    """Pure-JAX reference mirroring the PyTorch forward."""
    N, C, H, W = x.shape
    Ca = C // 2
    Cb = C - Ca
    x_flat = x.reshape(N, C, H * W)
    x_a, x_b = x_flat[:, :Ca], x_flat[:, Ca:]
    h = jnp.maximum(jnp.einsum('hc,ncp->nhp', w1, x_a) + b1[None], 0.0)
    out = jnp.einsum('oh,nhp->nop', w2, h) + b2[None]
    s = jax.nn.sigmoid(out[:, :Cb]) + 0.5
    t = out[:, Cb:]
    y_b = s * x_b + t
    y = jnp.concatenate([x_a, y_b], axis=1).reshape(N, C, H, W)
    jac = jnp.sum(jnp.log(s), axis=1, keepdims=True).reshape(N, 1, H, W)
    return y, jac


if __name__ == "__main__":
    key = jax.random.PRNGKey(0)
    k_x, k_w1, k_b1, k_w2, k_b2 = jax.random.split(key, 5)

    N, C, H, W = 2, 4, 16, 16
    hidden = 32
    Ca = C // 2
    Cb = C - Ca

    x = jax.random.normal(k_x, (N, C, H, W), dtype=jnp.float32)
    # Deterministic synthetic parameters for the 1x1-conv coupling block.
    w1 = 0.2 * jax.random.normal(k_w1, (hidden, Ca), dtype=jnp.float32)
    b1 = 0.1 * jax.random.normal(k_b1, (hidden, 1), dtype=jnp.float32)
    w2 = 0.2 * jax.random.normal(k_w2, (2 * Cb, hidden), dtype=jnp.float32)
    b2 = 0.1 * jax.random.normal(k_b2, (2 * Cb, 1), dtype=jnp.float32)

    y_ref, jac_ref = affine_coupling_reference(x, w1, b1, w2, b2)

    # f32 matmul path (bit-faithful to the PyTorch module).
    y, jac = affine_coupling_forward(x, w1, b1, w2, b2)
    jax.block_until_ready((y, jac))
    assert y.shape == (N, C, H, W) and jac.shape == (N, 1, H, W)
    assert jnp.allclose(y, y_ref, atol=1e-5, rtol=1e-5)
    assert jnp.allclose(jac, jac_ref, atol=1e-5, rtol=1e-5)

    # bf16 matmul operands, f32 accumulation + f32 sigmoid/log epilogue.
    y16, jac16 = affine_coupling_forward(x, w1, b1, w2, b2,
                                         compute_dtype=jnp.bfloat16)
    jax.block_until_ready((y16, jac16))
    assert jnp.allclose(y16, y_ref, atol=5e-2, rtol=5e-2)
    assert jnp.allclose(jac16, jac_ref, atol=5e-2, rtol=5e-2)

    print("KERNEL_OK")
</pallas_src>

<mosaic_0001>
module attributes {stable_mosaic.version = 11 : i64} {
  func.func @affine_coupling_kernel(%arg0: i32, %arg1: i32, %arg2: memref<1x4x256xf32, #tpu.memory_space<vmem>>, %arg3: memref<32x2xf32, #tpu.memory_space<vmem>>, %arg4: memref<32x1xf32, #tpu.memory_space<vmem>>, %arg5: memref<4x32xf32, #tpu.memory_space<vmem>>, %arg6: memref<4x1xf32, #tpu.memory_space<vmem>>, %arg7: memref<1x4x256xf32, #tpu.memory_space<vmem>>, %arg8: memref<1x1x256xf32, #tpu.memory_space<vmem>>) attributes {dimension_semantics = [#tpu.dimension_semantics<parallel>, #tpu.dimension_semantics<parallel>], iteration_bounds = array<i64: 2, 1>, scalar_prefetch = 0 : i64, scratch_operands = 0 : i64, tpu.core_type = #tpu.core_type<tc>, window_params = [{transform_indices = @transform_0, window_bounds = array<i64: 1, 4, 256>}, {pipeline_mode = #tpu.pipeline_mode<synchronous>, transform_indices = @transform_1, window_bounds = array<i64: 32, 2>}, {pipeline_mode = #tpu.pipeline_mode<synchronous>, transform_indices = @transform_2, window_bounds = array<i64: 32, 1>}, {pipeline_mode = #tpu.pipeline_mode<synchronous>, transform_indices = @transform_3, window_bounds = array<i64: 4, 32>}, {pipeline_mode = #tpu.pipeline_mode<synchronous>, transform_indices = @transform_4, window_bounds = array<i64: 4, 1>}, {transform_indices = @transform_5, window_bounds = array<i64: 1, 4, 256>}, {transform_indices = @transform_6, window_bounds = array<i64: 1, 1, 256>}]} {
    %c0 = arith.constant 0 : index
    %c0_0 = arith.constant 0 : index
    %c0_1 = arith.constant 0 : index
    %0 = vector.load %arg2[%c0, %c0_0, %c0_1] : memref<1x4x256xf32, #tpu.memory_space<vmem>>, vector<1x4x256xf32>
    %1 = vector.shape_cast %0 : vector<1x4x256xf32> to vector<4x256xf32>
    %2 = vector.extract_strided_slice %1 {offsets = [0, 0], sizes = [2, 256], strides = [1, 1]} : vector<4x256xf32> to vector<2x256xf32>
    %3 = vector.extract_strided_slice %1 {offsets = [2, 0], sizes = [2, 256], strides = [1, 1]} : vector<4x256xf32> to vector<2x256xf32>
    %c0_2 = arith.constant 0 : index
    %c0_3 = arith.constant 0 : index
    %4 = vector.load %arg3[%c0_2, %c0_3] : memref<32x2xf32, #tpu.memory_space<vmem>>, vector<32x2xf32>
    %cst = arith.constant dense<0.000000e+00> : vector<32x256xf32>
    %5 = tpu.matmul %4, %2, %cst {dimension_numbers = #tpu.dot_dimension_numbers<[1], [0], [0], [1], [0, 0, 1, 1], [], []>} : vector<32x2xf32>, vector<2x256xf32>, vector<32x256xf32> -> vector<32x256xf32>
    %c0_4 = arith.constant 0 : index
    %c0_5 = arith.constant 0 : index
    %6 = vector.load %arg4[%c0_4, %c0_5] : memref<32x1xf32, #tpu.memory_space<vmem>>, vector<32x1xf32>
    %7 = vector.broadcast %6 : vector<32x1xf32> to vector<32x256xf32>
    %8 = arith.addf %5, %7 : vector<32x256xf32>
    %cst_6 = arith.constant 0.000000e+00 : f32
    %9 = vector.broadcast %cst_6 : f32 to vector<32x256xf32>
    %10 = arith.maximumf %8, %9 : vector<32x256xf32>
    %c0_7 = arith.constant 0 : index
    %c0_8 = arith.constant 0 : index
    %11 = vector.load %arg5[%c0_7, %c0_8] : memref<4x32xf32, #tpu.memory_space<vmem>>, vector<4x32xf32>
    %cst_9 = arith.constant dense<0.000000e+00> : vector<4x256xf32>
    %12 = tpu.matmul %11, %10, %cst_9 {dimension_numbers = #tpu.dot_dimension_numbers<[1], [0], [0], [1], [0, 0, 1, 1], [], []>} : vector<4x32xf32>, vector<32x256xf32>, vector<4x256xf32> -> vector<4x256xf32>
    %c0_10 = arith.constant 0 : index
    %c0_11 = arith.constant 0 : index
    %13 = vector.load %arg6[%c0_10, %c0_11] : memref<4x1xf32, #tpu.memory_space<vmem>>, vector<4x1xf32>
    %14 = vector.broadcast %13 : vector<4x1xf32> to vector<4x256xf32>
    %15 = arith.addf %12, %14 : vector<4x256xf32>
    %16 = vector.extract_strided_slice %15 {offsets = [0, 0], sizes = [2, 256], strides = [1, 1]} : vector<4x256xf32> to vector<2x256xf32>
    %17 = arith.negf %16 : vector<2x256xf32>
    %18 = math.exp %17 : vector<2x256xf32>
    %cst_12 = arith.constant 1.000000e+00 : f32
    %19 = vector.broadcast %cst_12 : f32 to vector<2x256xf32>
    %20 = arith.addf %19, %18 : vector<2x256xf32>
    %21 = arith.divf %19, %20 : vector<2x256xf32>
    %cst_13 = arith.constant 5.000000e-01 : f32
    %22 = vector.broadcast %cst_13 : f32 to vector<2x256xf32>
    %23 = arith.addf %21, %22 : vector<2x256xf32>
    %24 = vector.extract_strided_slice %15 {offsets = [2, 0], sizes = [2, 256], strides = [1, 1]} : vector<4x256xf32> to vector<2x256xf32>
    %25 = arith.mulf %23, %3 : vector<2x256xf32>
    %26 = arith.addf %25, %24 : vector<2x256xf32>
    %27 = tpu.concatenate %2, %26 in 0 : vector<2x256xf32>, vector<2x256xf32> -> vector<4x256xf32>
    %c0_14 = arith.constant 0 : index
    %c0_15 = arith.constant 0 : index
    %c0_16 = arith.constant 0 : index
    %28 = vector.load %arg7[%c0_14, %c0_15, %c0_16] : memref<1x4x256xf32, #tpu.memory_space<vmem>>, vector<1x4x256xf32>
    %29 = vector.shape_cast %28 : vector<1x4x256xf32> to vector<4x256xf32>
    %30 = vector.shape_cast %27 : vector<4x256xf32> to vector<1x4x256xf32>
    tpu.vector_store %arg7[%c0_14, %c0_15, %c0_16], %30 {strides = array<i32>} : memref<1x4x256xf32, #tpu.memory_space<vmem>>, vector<1x4x256xf32>,
    %31 = math.log %23 : vector<2x256xf32>
    %cst_17 = arith.constant dense<0.000000e+00> : vector<256xf32>
    %32 = vector.multi_reduction <add>, %31, %cst_17 [0] : vector<2x256xf32> to vector<256xf32>
    %33 = vector.shape_cast %32 : vector<256xf32> to vector<1x256xf32>
    %c0_18 = arith.constant 0 : index
    %c0_19 = arith.constant 0 : index
    %c0_20 = arith.constant 0 : index
    %34 = vector.load %arg8[%c0_18, %c0_19, %c0_20] : memref<1x1x256xf32, #tpu.memory_space<vmem>>, vector<1x1x256xf32>
    %35 = vector.shape_cast %34 : vector<1x1x256xf32> to vector<1x256xf32>
    %36 = vector.shape_cast %33 : vector<1x256xf32> to vector<1x1x256xf32>
    tpu.vector_store %arg8[%c0_18, %c0_19, %c0_20], %36 {strides = array<i32>} : memref<1x1x256xf32, #tpu.memory_space<vmem>>, vector<1x1x256xf32>,
    return
  }
  func.func @transform_0(%arg0: i32, %arg1: i32) -> (i32, i32, i32) {
    %c0_i32 = arith.constant 0 : i32
    %c0_i32_0 = arith.constant 0 : i32
    return %arg0, %c0_i32, %arg1 : i32, i32, i32
  }
  func.func @transform_1(%arg0: i32, %arg1: i32) -> (i32, i32) {
    %c0_i32 = arith.constant 0 : i32
    %c0_i32_0 = arith.constant 0 : i32
    %c0_i32_1 = arith.constant 0 : i32
    return %c0_i32, %c0_i32_0 : i32, i32
  }
  func.func @transform_2(%arg0: i32, %arg1: i32) -> (i32, i32) {
    %c0_i32 = arith.constant 0 : i32
    %c0_i32_0 = arith.constant 0 : i32
    %c0_i32_1 = arith.constant 0 : i32
    return %c0_i32, %c0_i32_0 : i32, i32
  }
  func.func @transform_3(%arg0: i32, %arg1: i32) -> (i32, i32) {
    %c0_i32 = arith.constant 0 : i32
    %c0_i32_0 = arith.constant 0 : i32
    %c0_i32_1 = arith.constant 0 : i32
    return %c0_i32, %c0_i32_0 : i32, i32
  }
  func.func @transform_4(%arg0: i32, %arg1: i32) -> (i32, i32) {
    %c0_i32 = arith.constant 0 : i32
    %c0_i32_0 = arith.constant 0 : i32
    %c0_i32_1 = arith.constant 0 : i32
    return %c0_i32, %c0_i32_0 : i32, i32
  }
  func.func @transform_5(%arg0: i32, %arg1: i32) -> (i32, i32, i32) {
    %c0_i32 = arith.constant 0 : i32
    %c0_i32_0 = arith.constant 0 : i32
    return %arg0, %c0_i32, %arg1 : i32, i32, i32
  }
  func.func @transform_6(%arg0: i32, %arg1: i32) -> (i32, i32, i32) {
    %c0_i32 = arith.constant 0 : i32
    %c0_i32_0 = arith.constant 0 : i32
    return %arg0, %c0_i32, %arg1 : i32, i32, i32
  }
}

</mosaic_0001>

<llo_original>
// kernel: tpu_custom_call.1
$region0: #{tpu_custom_call.1}
  #allocation0 [shape = 'u32[]', space=smem, size = 0x4, offset = 0x4, fixed_abs, tag = 'smem constant byte address 0x4 - core index']
  #allocation1 [shape = 'u32[144,128]{1,0:T(1,128)}', space=vmem, size = 0x12000, scoped, tag = 'internal scratch']
  %s0 = inlined_call_operand.vmem [shape: f32[2,4,256], index: 0, kind: input, shape index: {}]
  %s1 = inlined_call_operand.vmem [shape: f32[32,2], index: 1, kind: input, shape index: {}]
  %s2 = inlined_call_operand.vmem [shape: f32[32,1], index: 2, kind: input, shape index: {}]
  %s3 = inlined_call_operand.vmem [shape: f32[4,32], index: 3, kind: input, shape index: {}]
  %s4 = inlined_call_operand.vmem [shape: f32[4,1], index: 4, kind: input, shape index: {}]
  %s5 = inlined_call_operand.hbm [shape: f32[2,4,256], index: 5, kind: output, shape index: {0}]
  %s6 = inlined_call_operand.hbm [shape: f32[2,1,256], index: 6, kind: output, shape index: {1}]
  %7 = xla_tuple %s5, %s6
  %s8 = sld [smem:[#allocation0]]
  $region61: #{tpu_custom_call.1} parent=0
    _
  %s10 = ssub.s32 1, %s8
  %s11 = scalar_select 0, %s10, %s8
  $region1: #{tpu_custom_call.1} parent=0
    #allocation2 [shape = 'u8[8192]{0}', space=vmem, size = 0x2000, scoped, tag = 'output window, operand 0']
    #allocation3 [shape = 's32[2]{0}', space=sflag, size = 0x8, scoped, tag = 'scoped memory for tpu_custom_call.1']
    #allocation4 [shape = 'u8[2048]{0}', space=vmem, size = 0x800, scoped, tag = 'output window, operand 1']
    #allocation5 [shape = 's32[2]{0}', space=sflag, size = 0x8, scoped, tag = 'scoped memory for tpu_custom_call.1']
    %12 = vsyncpa [#allocation3], 0
    %s13 = scalar_lea.sflag [#allocation3], 1
    %14 = vsyncpa %s13, 0
    %15 = vsyncpa [#allocation5], 0
    %s16 = scalar_lea.sflag [#allocation5], 1
    %17 = vsyncpa %s16, 0
    loop: start=0, step=1, limit=4
    $region2: #{tpu_custom_call.1} parent=1 // loop_pre_header
      _
    $region3: #{tpu_custom_call.1} parent=1 // loop_header
      %s19 = sphi 0, %s23
      %p20 = scmp.ge.s32.totalorder %s19, 4
      %s26 = sphi 0, %s38
      %s27 = sphi 0, %s34
      %s28 = sphi 0, %s26
      %s29 = sphi 0, %s27
      %s30 = sphi 0, %s28
      %s31 = sphi 0, %s29
      %s43 = sphi 0, %s45
      %s46 = sphi 0, %s43
      %s47 = sphi 0, %s46
      %s63 = sphi 0, %s47
      %s67 = sphi 0, %s67
      %s69 = sphi 0, %s67
      %s70 = sphi 0, %s69
      %s84 = sphi 0, %s70
      %s88 = sphi 0, %s88
      %s90 = sphi 0, %s88
      %s91 = sphi 0, %s90
      %s105 = sphi 0, %s91
      %s109 = sphi 0, %s109
      %s111 = sphi 0, %s109
      %s112 = sphi 0, %s111
      %s126 = sphi 0, %s112
      %s130 = sphi 0, %s130
      %s132 = sphi 0, %s130
      %s133 = sphi 0, %s132
      %s147 = sphi 0, %s133
      %s155 = sphi 0, %s157
      %s158 = sphi 0, %s155
      %s159 = sphi 0, %s158
      %s175 = sphi 0, %s159
      %s183 = sphi 0, %s185
      %s186 = sphi 0, %s183
      %s187 = sphi 0, %s186
      %s203 = sphi 0, %s187
    $region4: #{tpu_custom_call.1} parent=1 // loop_header_branch
      %22 = sbr.rel (%p20) target = $region8
    $region5: #{tpu_custom_call.1} parent=1 // loop_body
      %s24 = ssub.s32 %s19, 1
      %s25 = ssub.s32 %s19, 2
      %s32 = sadd.s32 1, %s27
      %p33 = scmp.ge.s32.totalorder %s32, 1
      %s34 = scalar_select %p33, 0, %s32
      %s35 = sadd.s32 1, %s26
      %s36 = scalar_select %p33, %s35, %s26
      %p37 = scmp.ge.s32.totalorder %s36, 2
      %s38 = scalar_select %p37, 0, %s36
      %s39 = ssub.s32 %s26, %s38
      %s40 = ssub.s32 %s27, %s34
      %s41 = sor.u32 %s39, %s40
      %p42 = scmp.eq.s32.totalorder %s41, 0
      %s44 = sadd.s32 %s43, 1
      %s45 = scalar_select %p42, %s43, %s44
      %p48 = pneg %p42
      %p49 = scmp.eq.s32.totalorder %s19, 1
      %p50 = por %p48, %p49
      %p51 = scmp.ne.s32.totalorder %s43, %s46
      %p52 = scmp.eq.s32.totalorder %s19, 0
      %p53 = por %p51, %p52
      %p54 = scmp.ne.s32.totalorder %s43, %s46
      %p55 = scmp.eq.s32.totalorder %s24, 1
      %p56 = por %p54, %p55
      %p57 = scmp.ne.s32.totalorder %s46, %s47
      %p58 = scmp.eq.s32.totalorder %s24, 0
      %p59 = por %p57, %p58
      %p60 = scmp.ne.s32.totalorder %s46, %s47
      %p61 = scmp.eq.s32.totalorder %s25, 1
      %p62 = por %p60, %p61
      %p64 = scmp.ne.s32.totalorder %s47, %s63
      %p65 = scmp.eq.s32.totalorder %s25, 0
      %p66 = por %p64, %p65
      %s68 = sadd.s32 %s67, 1
      %p71 = scmp.eq.s32.totalorder %s19, 1
      %p72 = scmp.ne.s32.totalorder %s67, %s69
      %p73 = scmp.eq.s32.totalorder %s19, 0
      %p74 = por %p72, %p73
      %p75 = scmp.ne.s32.totalorder %s67, %s69
      %p76 = scmp.eq.s32.totalorder %s24, 1
      %p77 = por %p75, %p76
      %p78 = scmp.ne.s32.totalorder %s69, %s70
      %p79 = scmp.eq.s32.totalorder %s24, 0
      %p80 = por %p78, %p79
      %p81 = scmp.ne.s32.totalorder %s69, %s70
      %p82 = scmp.eq.s32.totalorder %s25, 1
      %p83 = por %p81, %p82
      %p85 = scmp.ne.s32.totalorder %s70, %s84
      %p86 = scmp.eq.s32.totalorder %s25, 0
      %p87 = por %p85, %p86
      %s89 = sadd.s32 %s88, 1
      %p92 = scmp.eq.s32.totalorder %s19, 1
      %p93 = scmp.ne.s32.totalorder %s88, %s90
      %p94 = scmp.eq.s32.totalorder %s19, 0
      %p95 = por %p93, %p94
      %p96 = scmp.ne.s32.totalorder %s88, %s90
      %p97 = scmp.eq.s32.totalorder %s24, 1
      %p98 = por %p96, %p97
      %p99 = scmp.ne.s32.totalorder %s90, %s91
      %p100 = scmp.eq.s32.totalorder %s24, 0
      %p101 = por %p99, %p100
      %p102 = scmp.ne.s32.totalorder %s90, %s91
      %p103 = scmp.eq.s32.totalorder %s25, 1
      %p104 = por %p102, %p103
      %p106 = scmp.ne.s32.totalorder %s91, %s105
      %p107 = scmp.eq.s32.totalorder %s25, 0
      %p108 = por %p106, %p107
      %s110 = sadd.s32 %s109, 1
      %p113 = scmp.eq.s32.totalorder %s19, 1
      %p114 = scmp.ne.s32.totalorder %s109, %s111
      %p115 = scmp.eq.s32.totalorder %s19, 0
      %p116 = por %p114, %p115
      %p117 = scmp.ne.s32.totalorder %s109, %s111
      %p118 = scmp.eq.s32.totalorder %s24, 1
      %p119 = por %p117, %p118
      %p120 = scmp.ne.s32.totalorder %s111, %s112
      %p121 = scmp.eq.s32.totalorder %s24, 0
      %p122 = por %p120, %p121
      %p123 = scmp.ne.s32.totalorder %s111, %s112
      %p124 = scmp.eq.s32.totalorder %s25, 1
      %p125 = por %p123, %p124
      %p127 = scmp.ne.s32.totalorder %s112, %s126
      %p128 = scmp.eq.s32.totalorder %s25, 0
      %p129 = por %p127, %p128
      %s131 = sadd.s32 %s130, 1
      %p134 = scmp.eq.s32.totalorder %s19, 1
      %p135 = scmp.ne.s32.totalorder %s130, %s132
      %p136 = scmp.eq.s32.totalorder %s19, 0
      %p137 = por %p135, %p136
      %p138 = scmp.ne.s32.totalorder %s130, %s132
      %p139 = scmp.eq.s32.totalorder %s24, 1
      %p140 = por %p138, %p139
      %p141 = scmp.ne.s32.totalorder %s132, %s133
      %p142 = scmp.eq.s32.totalorder %s24, 0
      %p143 = por %p141, %p142
      %p144 = scmp.ne.s32.totalorder %s132, %s133
      %p145 = scmp.eq.s32.totalorder %s25, 1
      %p146 = por %p144, %p145
      %p148 = scmp.ne.s32.totalorder %s133, %s147
      %p149 = scmp.eq.s32.totalorder %s25, 0
      %p150 = por %p148, %p149
      %s151 = ssub.s32 %s26, %s38
      %s152 = ssub.s32 %s27, %s34
      %s153 = sor.u32 %s151, %s152
      %p154 = scmp.eq.s32.totalorder %s153, 0
      %s156 = sadd.s32 %s155, 1
      %s157 = scalar_select %p154, %s155, %s156
      %p160 = pneg %p154
      %p161 = scmp.eq.s32.totalorder %s19, 1
      %p162 = por %p160, %p161
      %p163 = scmp.ne.s32.totalorder %s155, %s158
      %p164 = scmp.eq.s32.totalorder %s19, 0
      %p165 = por %p163, %p164
      %p166 = scmp.ne.s32.totalorder %s155, %s158
      %p167 = scmp.eq.s32.totalorder %s24, 1
      %p168 = por %p166, %p167
      %p169 = scmp.ne.s32.totalorder %s158, %s159
      %p170 = scmp.eq.s32.totalorder %s24, 0
      %p171 = por %p169, %p170
      %p172 = scmp.ne.s32.totalorder %s158, %s159
      %p173 = scmp.eq.s32.totalorder %s25, 1
      %p174 = por %p172, %p173
      %p176 = scmp.ne.s32.totalorder %s159, %s175
      %p177 = scmp.eq.s32.totalorder %s25, 0
      %p178 = por %p176, %p177
      %s179 = ssub.s32 %s26, %s38
      %s180 = ssub.s32 %s27, %s34
      %s181 = sor.u32 %s179, %s180
      %p182 = scmp.eq.s32.totalorder %s181, 0
      %s184 = sadd.s32 %s183, 1
      %s185 = scalar_select %p182, %s183, %s184
      %p188 = pneg %p182
      %p189 = scmp.eq.s32.totalorder %s19, 1
      %p190 = por %p188, %p189
      %p191 = scmp.ne.s32.totalorder %s183, %s186
      %p192 = scmp.eq.s32.totalorder %s19, 0
      %p193 = por %p191, %p192
      %p194 = scmp.ne.s32.totalorder %s183, %s186
      %p195 = scmp.eq.s32.totalorder %s24, 1
      %p196 = por %p194, %p195
      %p197 = scmp.ne.s32.totalorder %s186, %s187
      %p198 = scmp.eq.s32.totalorder %s24, 0
      %p199 = por %p197, %p198
      %p200 = scmp.ne.s32.totalorder %s186, %s187
      %p201 = scmp.eq.s32.totalorder %s25, 1
      %p202 = por %p200, %p201
      %p204 = scmp.ne.s32.totalorder %s187, %s203
      %p205 = scmp.eq.s32.totalorder %s25, 0
      %p206 = por %p204, %p205
      %p207 = scmp.le.s32.totalorder 1, %s19
      %p208 = scmp.lt.s32.totalorder %s19, 3
      %p209 = pnand %p207, %p208
      %p210 = pneg %p209
      // Predicated region
      $region9: #{tpu_custom_call.1} parent=5 // pred_check
        _
      $region10: #{tpu_custom_call.1} parent=5 // pred_check_branch
        %212 = sbr.rel (%p209) target = $region12
      $region11: #{tpu_custom_call.1} parent=5 // pred_region
        %s213 = ssub.s32 %s19, 1
        // Predicated region
        $region13: #{tpu_custom_call.1} parent=11 // pred_check
          %p214 = pneg %p80
        $region14: #{tpu_custom_call.1} parent=11 // pred_check_branch
          %216 = sbr.rel (%p214) target = $region16
        $region15: #{tpu_custom_call.1} parent=11 // pred_region
          _
        $region16: #{tpu_custom_call.1} parent=11 // pred_fallthru
          _
        // Predicated region
        $region17: #{tpu_custom_call.1} parent=11 // pred_check
          %p217 = pneg %p101
        $region18: #{tpu_custom_call.1} parent=11 // pred_check_branch
          %219 = sbr.rel (%p217) target = $region20
        $region19: #{tpu_custom_call.1} parent=11 // pred_region
          _
        $region20: #{tpu_custom_call.1} parent=11 // pred_fallthru
          _
        // Predicated region
        $region21: #{tpu_custom_call.1} parent=11 // pred_check
          %p220 = pneg %p122
        $region22: #{tpu_custom_call.1} parent=11 // pred_check_branch
          %222 = sbr.rel (%p220) target = $region24
        $region23: #{tpu_custom_call.1} parent=11 // pred_region
          _
        $region24: #{tpu_custom_call.1} parent=11 // pred_fallthru
          _
        // Predicated region
        $region25: #{tpu_custom_call.1} parent=11 // pred_check
          %p223 = pneg %p143
        $region26: #{tpu_custom_call.1} parent=11 // pred_check_branch
          %225 = sbr.rel (%p223) target = $region28
        $region27: #{tpu_custom_call.1} parent=11 // pred_region
          _
        $region28: #{tpu_custom_call.1} parent=11 // pred_fallthru
          _
      $region12: #{tpu_custom_call.1} parent=5 // pred_fallthru
        _
      %p226 = scmp.lt.s32.totalorder %s19, 2
      // Predicated region
      $region29: #{tpu_custom_call.1} parent=5 // pred_check
        %p227 = pneg %p226
      $region30: #{tpu_custom_call.1} parent=5 // pred_check_branch
        %229 = sbr.rel (%p227) target = $region32
      $region31: #{tpu_custom_call.1} parent=5 // pred_region
        // Predicated region
        $region33: #{tpu_custom_call.1} parent=31 // pred_check
          %p230 = pneg %p53
        $region34: #{tpu_custom_call.1} parent=31 // pred_check_branch
          %232 = sbr.rel (%p230) target = $region36
        $region35: #{tpu_custom_call.1} parent=31 // pred_region
          %s233 = smul.u32 2, %s27
          %p234 = scmp.lt.s32.totalorder %s26, 1
          %s235 = scalar_select %p234, %s26, 1
          %p236 = scmp.lt.s32.totalorder %s233, 1
          %s237 = scalar_select %p236, %s233, 1
          %s238 = smul.addr %s235, 2
          %s239 = sadd.s32 %s237, %s238
          %s240 = smul.addr %s239, 4
          %s241 = scalar_lea.vmem %s0, %s240
          %s242 = smul.u32 2, %s27
        $region36: #{tpu_custom_call.1} parent=31 // pred_fallthru
          _
      $region32: #{tpu_custom_call.1} parent=5 // pred_fallthru
        _
      %p243 = scmp.le.s32.totalorder 1, %s19
      %p244 = scmp.lt.s32.totalorder %s19, 3
      %p245 = pnand %p243, %p244
      %p246 = pneg %p245
      // Predicated region
      $region37: #{tpu_custom_call.1} parent=5 // pred_check
        _
      $region38: #{tpu_custom_call.1} parent=5 // pred_check_branch
        %248 = sbr.rel (%p245) target = $region40
      $region39: #{tpu_custom_call.1} parent=5 // pred_region
        %s249 = ssub.s32 %s19, 1
        %s250 = smul.u32 2, %s29
        %p251 = scmp.lt.s32.totalorder %s28, 1
        %s252 = scalar_select %p251, %s28, 1
        %p253 = scmp.lt.s32.totalorder %s250, 1
        %s254 = scalar_select %p253, %s250, 1
        %s255 = smul.addr %s252, 2
        %s256 = sadd.s32 %s254, %s255
        %s257 = smul.addr %s256, 4
        %s258 = scalar_lea.vmem %s0, %s257
        %p259 = pneg %p59
        %p260 = pneg %p56
        %p261 = pneg %p80
        %p262 = pneg %p77
        %p263 = pneg %p101
        %p264 = pneg %p98
        %p265 = pneg %p122
        %p266 = pneg %p119
        %p267 = pneg %p143
        %p268 = pneg %p140
        %p269 = pneg %p171
        %p270 = pneg %p168
        %s271 = sand.u32 %s158, 1
        %s272 = scalar_lea.sflag [#allocation3], %s271
        %s273 = sand.u32 %s158, 1
        %s274 = smul.addr %s273, 8
        %s275 = scalar_lea.vmem [#allocation2], %s274
        %p276 = pneg %p199
        %p277 = pneg %p196
        %s278 = sand.u32 %s186, 1
        %s279 = scalar_lea.sflag [#allocation5], %s278
        %s280 = sand.u32 %s186, 1
        %s281 = smul.addr %s280, 2
        %s282 = scalar_lea.vmem [#allocation4], %s281
        %s283 = smul.u32 2, %s29
        %p284 = scmp.lt.s32.totalorder %s28, 1
        %s285 = scalar_select %p284, %s28, 1
        %p286 = scmp.lt.s32.totalorder %s283, 1
        %s287 = scalar_select %p286, %s283, 1
        %s288 = smul.addr %s285, 2
        %s289 = sadd.s32 %s287, %s288
        %s290 = smul.addr %s289, 4
        %s291 = scalar_lea.vmem %s0, %s290
        %s292 = smul.u32 2, %s29
        %s293 = smul.u32 2, %s29
        %s294 = smul.u32 2, %s29
        %v295 = vld [vmem:[%s291] sm:$0xff]
        %v296 = vld [vmem:[%s1] sm:$0xff]
        %v297 = vld [vmem:[%s1 + $0x8] sm:$0xff]
        %v298 = vld [vmem:[%s1 + $0x10] sm:$0xff]
        %v299 = vld [vmem:[%s1 + $0x18] sm:$0xff]
        %v300 = vld [vmem:[%s2] sm:$0xff]
        %v301 = vld [vmem:[%s2 + $0x8] sm:$0xff]
        %v302 = vld [vmem:[%s2 + $0x10] sm:$0xff]
        %v303 = vld [vmem:[%s2 + $0x18] sm:$0xff]
        %305 = vset.pattern.permute.xlu0 0
        %306 = vperm.xlu0 %305, %v300
        %v307 = vpop.permute.xlu0 %306
        %310 = vset.pattern.permute.xlu0 0
        %311 = vperm.xlu0 %310, %v301
        %v312 = vpop.permute.xlu0 %311
        %315 = vset.pattern.permute.xlu0 0
        %316 = vperm.xlu0 %315, %v302
        %v317 = vpop.permute.xlu0 %316
        %320 = vset.pattern.permute.xlu0 0
        %321 = vperm.xlu0 %320, %v303
        %v322 = vpop.permute.xlu0 %321
        %v325 = vcombine.high %v295, %v295
        %vm326 = vcmask 15360
        %v328 = vsel %vm326, %v296, 0
        %v331 = vsel %vm326, %v297, 0
        %v334 = vsel %vm326, %v298, 0
        %v337 = vsel %vm326, %v299, 0
        %vm339 = vcmask 1041408
        %v340 = vsel %vm339, %v295, 0
        %v342 = vsel %vm339, %v325, 0
        %344 = vmatprep.subr.mxu0 0.0
        %345 = vmatpush1.msra.mxu0 0.0
        %346 = vmatprep.subr.mxu0 0.0
        %347 = vmatpush1.msra.mxu0 0.0
        %348 = vmatprep.subr.mxu0 0.0
        %349 = vmatpush1.msra.mxu0 0.0
        %350 = vmatprep.subr.mxu0 0.0
        %351 = vmatpush1.msra.mxu0 0.0
        %352 = vmatprep.subr.mxu0 0.0
        %353 = vmatpush1.msra.mxu0 0.0
        %354 = vmatprep.subr.mxu0 0.0
        %355 = vmatpush1.msra.mxu0 0.0
        %356 = vmatprep.subr.mxu0 0.0
        %357 = vmatpush1.msra.mxu0 0.0
        %358 = vmatprep.subr.mxu0 0.0
        %359 = vmatpush1.msra.mxu0 0.0
        %360 = vmatprep.subr.mxu0 0.0
        %361 = vmatpush1.msra.mxu0 0.0
        %362 = vmatprep.subr.mxu0 0.0
        %363 = vmatpush1.msra.mxu0 0.0
        %364 = vmatprep.subr.mxu0 0.0
        %365 = vmatpush1.msra.mxu0 0.0
        %366 = vmatprep.subr.mxu0 0.0
        %367 = vmatpush1.msra.mxu0 0.0
        %368 = vmatprep.subr.mxu0 0.0
        %369 = vmatpush1.msra.mxu0 0.0
        %370 = vmatprep.subr.mxu0 0.0
        %371 = vmatpush1.msra.mxu0 0.0
        %372 = vmatprep.subr.mxu0 0.0
        %373 = vmatpush1.msra.mxu0 0.0
        %374 = vmatprep.subr.mxu0 %v342
        %375 = vmatpush1.msra.mxu0 %v340
        %376 = vmatprep.subr.mxu0 0.0
        %377 = vmatpush2.msra.mxu0 0.0
        %378 = vmatprep.subr.mxu0 0.0
        %379 = vmatpush2.msra.mxu0 0.0
        %380 = vmatprep.subr.mxu0 0.0
        %381 = vmatpush2.msra.mxu0 0.0
        %382 = vmatprep.subr.mxu0 0.0
        %383 = vmatpush2.msra.mxu0 0.0
        %384 = vmatprep.subr.mxu0 0.0
        %385 = vmatpush2.msra.mxu0 0.0
        %386 = vmatprep.subr.mxu0 0.0
        %387 = vmatpush2.msra.mxu0 0.0
        %388 = vmatprep.subr.mxu0 0.0
        %389 = vmatpush2.msra.mxu0 0.0
        %390 = vmatprep.subr.mxu0 0.0
        %391 = vmatpush2.msra.mxu0 0.0
        %392 = vmatprep.subr.mxu0 0.0
        %393 = vmatpush2.msra.mxu0 0.0
        %394 = vmatprep.subr.mxu0 0.0
        %395 = vmatpush2.msra.mxu0 0.0
        %396 = vmatprep.subr.mxu0 0.0
        %397 = vmatpush2.msra.mxu0 0.0
        %398 = vmatprep.subr.mxu0 0.0
        %399 = vmatpush2.msra.mxu0 0.0
        %400 = vmatprep.subr.mxu0 0.0
        %401 = vmatpush2.msra.mxu0 0.0
        %402 = vmatprep.subr.mxu0 0.0
        %403 = vmatpush2.msra.mxu0 0.0
        %404 = vmatprep.subr.mxu0 0.0
        %405 = vmatpush2.msra.mxu0 0.0
        %406 = vmatprep.subr.mxu0 0.0
        %407 = vmatpush2.msra.mxu0 0.0
        %408 = vmatprep.mubr.f32.mxu0 0.0
        %409 = vmatmul.mubr.f32.gmra.mxu0 %v328
        %v410 = vpop.f32.mrf.mxu0
        %v411 = vadd.f32 %v307, %v410
        %v412 = vpop.f32.mrf.mxu0
        %v413 = vadd.f32 %v307, %v412
        %414 = vmatprep.mubr.f32.mxu0 0.0
        %415 = vmatmul.mubr.f32.gmra.mxu0 %v331
        %v416 = vpop.f32.mrf.mxu0
        %v417 = vadd.f32 %v312, %v416
        %v418 = vpop.f32.mrf.mxu0
        %v419 = vadd.f32 %v312, %v418
        %420 = vmatprep.mubr.f32.mxu0 0.0
        %421 = vmatmul.mubr.f32.gmra.mxu0 %v334
        %v422 = vpop.f32.mrf.mxu0
        %v423 = vadd.f32 %v317, %v422
        %v424 = vpop.f32.mrf.mxu0
        %v425 = vadd.f32 %v317, %v424
        %426 = vmatprep.mubr.f32.mxu0 0.0
        %427 = vmatmul.mubr.f32.gmra.mxu0 %v337
        %v428 = vpop.f32.mrf.mxu0
        %v429 = vadd.f32 %v322, %v428
        %v430 = vpop.f32.mrf.mxu0
        %v431 = vadd.f32 %v322, %v430
        %432 = vdwg.mxu0
        %v433 = vmax.f32 %v411, 0.0
        %v434 = vmax.f32 %v413, 0.0
        %v435 = vmax.f32 %v417, 0.0
        %v436 = vmax.f32 %v419, 0.0
        %v437 = vmax.f32 %v423, 0.0
        %v438 = vmax.f32 %v425, 0.0
        %v439 = vmax.f32 %v429, 0.0
        %v440 = vmax.f32 %v431, 0.0
        %v441 = vld [vmem:[%s3] sm:$0xf]
        %v442 = vld [vmem:[%s4] sm:$0xf]
        %444 = vset.pattern.permute.xlu0 0
        %445 = vperm.xlu0 %444, %v442
        %v446 = vpop.permute.xlu0 %445
        %vm448 = vcmask 261120
        %v450 = vsel %vm448, %v441, 0
        %452 = vmatprep.subr.mxu0 0.0
        %453 = vmatpush1.msra.mxu0 0.0
        %454 = vmatprep.subr.mxu0 0.0
        %455 = vmatpush1.msra.mxu0 0.0
        %456 = vmatprep.subr.mxu0 0.0
        %457 = vmatpush1.msra.mxu0 0.0
        %458 = vmatprep.subr.mxu0 0.0
        %459 = vmatpush1.msra.mxu0 0.0
        %460 = vmatprep.subr.mxu0 0.0
        %461 = vmatpush1.msra.mxu0 0.0
        %462 = vmatprep.subr.mxu0 0.0
        %463 = vmatpush1.msra.mxu0 0.0
        %464 = vmatprep.subr.mxu0 0.0
        %465 = vmatpush1.msra.mxu0 0.0
        %466 = vmatprep.subr.mxu0 0.0
        %467 = vmatpush1.msra.mxu0 0.0
        %468 = vmatprep.subr.mxu0 0.0
        %469 = vmatpush1.msra.mxu0 0.0
        %470 = vmatprep.subr.mxu0 0.0
        %471 = vmatpush1.msra.mxu0 0.0
        %472 = vmatprep.subr.mxu0 0.0
        %473 = vmatpush1.msra.mxu0 0.0
        %474 = vmatprep.subr.mxu0 0.0
        %475 = vmatpush1.msra.mxu0 0.0
        %476 = vmatprep.subr.mxu0 %v440
        %477 = vmatpush1.msra.mxu0 %v439
        %478 = vmatprep.subr.mxu0 %v438
        %479 = vmatpush1.msra.mxu0 %v437
        %480 = vmatprep.subr.mxu0 %v436
        %481 = vmatpush1.msra.mxu0 %v435
        %482 = vmatprep.subr.mxu0 %v434
        %483 = vmatpush1.msra.mxu0 %v433
        %484 = vmatprep.subr.mxu0 0.0
        %485 = vmatpush2.msra.mxu0 0.0
        %486 = vmatprep.subr.mxu0 0.0
        %487 = vmatpush2.msra.mxu0 0.0
        %488 = vmatprep.subr.mxu0 0.0
        %489 = vmatpush2.msra.mxu0 0.0
        %490 = vmatprep.subr.mxu0 0.0
        %491 = vmatpush2.msra.mxu0 0.0
        %492 = vmatprep.subr.mxu0 0.0
        %493 = vmatpush2.msra.mxu0 0.0
        %494 = vmatprep.subr.mxu0 0.0
        %495 = vmatpush2.msra.mxu0 0.0
        %496 = vmatprep.subr.mxu0 0.0
        %497 = vmatpush2.msra.mxu0 0.0
        %498 = vmatprep.subr.mxu0 0.0
        %499 = vmatpush2.msra.mxu0 0.0
        %500 = vmatprep.subr.mxu0 0.0
        %501 = vmatpush2.msra.mxu0 0.0
        %502 = vmatprep.subr.mxu0 0.0
        %503 = vmatpush2.msra.mxu0 0.0
        %504 = vmatprep.subr.mxu0 0.0
        %505 = vmatpush2.msra.mxu0 0.0
        %506 = vmatprep.subr.mxu0 0.0
        %507 = vmatpush2.msra.mxu0 0.0
        %508 = vmatprep.subr.mxu0 0.0
        %509 = vmatpush2.msra.mxu0 0.0
        %510 = vmatprep.subr.mxu0 0.0
        %511 = vmatpush2.msra.mxu0 0.0
        %512 = vmatprep.subr.mxu0 0.0
        %513 = vmatpush2.msra.mxu0 0.0
        %514 = vmatprep.subr.mxu0 0.0
        %515 = vmatpush2.msra.mxu0 0.0
        %516 = vmatprep.mubr.f32.mxu0 0.0
        %517 = vmatmul.mubr.f32.gmra.mxu0 %v450
        %v518 = vpop.f32.mrf.mxu0
        %v519 = vadd.f32 %v446, %v518
        %v520 = vpop.f32.mrf.mxu0
        %v521 = vadd.f32 %v446, %v520
        %522 = vdwg.mxu0
        %v523 = vxor.u32 %v519, 2147483648
        %v524 = vxor.u32 %v521, 2147483648
        %v525 = vmul.f32 %v523, 1.442695
        %v526 = vpow.pop %v525
        %v527 = vmul.f32 %v524, 1.442695
        %v528 = vpow.pop %v527
        %v529 = vadd.f32 %v526, 1.0
        %v530 = vadd.f32 %v528, 1.0
        %v531 = vrcp.pop %v529
        %v532 = vmul.f32 1.0, %v531
        %v533 = vrcp.pop %v530
        %v534 = vmul.f32 1.0, %v533
        %v535 = vadd.f32 %v532, 0.5
        %v536 = vadd.f32 %v534, 0.5
        %v537 = vrot.slane %v295, 2
        %v538 = vrot.slane %v325, 2
        %v541 = vmul.f32 %v535, %v537
        %v542 = vmul.f32 %v536, %v538
        %v545 = vrot.slane %v519, 2
        %v546 = vrot.slane %v521, 2
        %v549 = vadd.f32 %v541, %v545
        %v550 = vadd.f32 %v542, %v546
        %v554 = vrot.slane %v549, 6
        %v555 = vrot.slane %v550, 6
        %v558 = vsel %vm339, %v295, %v554
        %v559 = vsel %vm339, %v325, %v555
        %v562 = vcombine.low %v558, %v559
        %564 = vst [vmem:[%s275] sm:$0xff] %v562
        %v565 = vlog2.pop %v535
        %v566 = vmul.f32 %v565, 0.6931472
        %v567 = vlog2.pop %v536
        %v568 = vmul.f32 %v567, 0.6931472
        %v569 = vsel %vm339, %v566, 0.0
        %v570 = vrot.slane %v569, 4
        %v571 = vadd.f32 %v569, %v570
        %v572 = vrot.slane %v571, 2
        %v573 = vadd.f32 %v571, %v572
        %v574 = vrot.slane %v573, 1
        %v575 = vadd.f32 %v573, %v574
        %v576 = vsel %vm339, %v568, 0.0
        %v577 = vrot.slane %v576, 4
        %v578 = vadd.f32 %v576, %v577
        %v579 = vrot.slane %v578, 2
        %v580 = vadd.f32 %v578, %v579
        %v581 = vrot.slane %v580, 1
        %v582 = vadd.f32 %v580, %v581
        %v585 = vcombine.low %v575, %v582
        %v587 = vunpack.c.l.s4 1966171168
        %v588 = vunpack.c.0.s8 %v587
        %v589 = vlaneseq
        %v590 = vshrl.u32 %v589, 7
        %v591 = vsub.s32 %v588, %v590
        %v592 = vrot.slane %v585, %v591
        %v594 = vunpack.c.l.s4 1966171168
        %v595 = vunpack.c.0.s8 %v594
        %v596 = vlaneseq
        %v597 = vshrl.u32 %v596, 7
        %v598 = vsub.s32 %v595, %v597
        %v599 = vrot.slane %v592, %v598
        %v601 = vlaneseq
        %vm602 = vcmp.ge.s32.totalorder %v601, 0
        %vm603 = vcmp.lt.s32.totalorder %v601, 256
        %vm604 = vmand %vm602, %vm603
        %605 = vst.msk [vmem:[%s282] sm:$0x3] %vm604, %v599
        %s606 = sand.u32 %s158, 1
        %s607 = scalar_lea.sflag [#allocation3], %s606
        %s608 = sand.u32 %s158, 1
        %s609 = smul.addr %s608, 8
        %s610 = scalar_lea.vmem [#allocation2], %s609
        %s611 = sand.u32 %s186, 1
        %s612 = scalar_lea.sflag [#allocation5], %s611
        %s613 = sand.u32 %s186, 1
        %s614 = smul.addr %s613, 2
        %s615 = scalar_lea.vmem [#allocation4], %s614
        // Predicated region
        $region41: #{tpu_custom_call.1} parent=39 // pred_check
          %p616 = pneg %p168
        $region42: #{tpu_custom_call.1} parent=39 // pred_check_branch
          %618 = sbr.rel (%p616) target = $region44
        $region43: #{tpu_custom_call.1} parent=39 // pred_region
          %s619 = smul.u32 2, %s29
          %s621 = ssub.s32 128, 128
          %622 = vsyncadd %s607, %s621
          %s623 = smul.addr %s28, 2
          %s624 = sadd.s32 %s619, %s623
          %s625 = smul.addr %s624, 64
          %s626 = scalar_lea.hbm %s5, %s625
          %s628 = sshll.u32 %s610, 4
          %s629 = int_to_ptr.vmem [resolvable:$true] %s628
          %631 = dma.vmem_to_hbm [thread:$0]  %s629, 128, %s626, %s607
        $region44: #{tpu_custom_call.1} parent=39 // pred_fallthru
          _
        // Predicated region
        $region45: #{tpu_custom_call.1} parent=39 // pred_check
          %p632 = pneg %p196
        $region46: #{tpu_custom_call.1} parent=39 // pred_check_branch
          %634 = sbr.rel (%p632) target = $region48
        $region47: #{tpu_custom_call.1} parent=39 // pred_region
          %s635 = smul.u32 2, %s29
          %s637 = ssub.s32 32, 32
          %638 = vsyncadd %s612, %s637
          %s639 = smul.addr %s28, 2
          %s640 = sadd.s32 %s635, %s639
          %s641 = smul.addr %s640, 16
          %s642 = scalar_lea.hbm %s6, %s641
          %s644 = sshll.u32 %s615, 4
          %s645 = int_to_ptr.vmem [resolvable:$true] %s644
          %647 = dma.vmem_to_hbm [thread:$0]  %s645, 32, %s642, %s612
        $region48: #{tpu_custom_call.1} parent=39 // pred_fallthru
          _
      $region40: #{tpu_custom_call.1} parent=5 // pred_fallthru
        _
      %p648 = scmp.le.s32.totalorder 2, %s19
      // Predicated region
      $region49: #{tpu_custom_call.1} parent=5 // pred_check
        %p649 = pneg %p648
      $region50: #{tpu_custom_call.1} parent=5 // pred_check_branch
        %651 = sbr.rel (%p649) target = $region52
      $region51: #{tpu_custom_call.1} parent=5 // pred_region
        %s652 = ssub.s32 %s19, 2
        // Predicated region
        $region53: #{tpu_custom_call.1} parent=51 // pred_check
          %p653 = pneg %p174
        $region54: #{tpu_custom_call.1} parent=51 // pred_check_branch
          %655 = sbr.rel (%p653) target = $region56
        $region55: #{tpu_custom_call.1} parent=51 // pred_region
          %s656 = sand.u32 %s159, 1
          %s657 = scalar_lea.sflag [#allocation3], %s656
          %s658 = sand.u32 %s159, 1
          %s659 = smul.addr %s658, 8
          %s660 = scalar_lea.vmem [#allocation2], %s659
          %661 = dma.done %s657, 128
        $region56: #{tpu_custom_call.1} parent=51 // pred_fallthru
          _
        // Predicated region
        $region57: #{tpu_custom_call.1} parent=51 // pred_check
          %p662 = pneg %p202
        $region58: #{tpu_custom_call.1} parent=51 // pred_check_branch
          %664 = sbr.rel (%p662) target = $region60
        $region59: #{tpu_custom_call.1} parent=51 // pred_region
          %s665 = sand.u32 %s187, 1
          %s666 = scalar_lea.sflag [#allocation5], %s665
          %s667 = sand.u32 %s187, 1
          %s668 = smul.addr %s667, 2
          %s669 = scalar_lea.vmem [#allocation4], %s668
          %670 = dma.done %s666, 32
        $region60: #{tpu_custom_call.1} parent=51 // pred_fallthru
          _
      $region52: #{tpu_custom_call.1} parent=5 // pred_fallthru
        _
    $region6: #{tpu_custom_call.1} parent=1 // loop_footer
      %s23 = sadd.s32 1, %s19
    $region7: #{tpu_custom_call.1} parent=1 // loop_footer_branch
      %18 = sbr.rel target = $region3
    $region8: #{tpu_custom_call.1} parent=1 // loop_exit
      _
    %671 = vsyncpa [#allocation3], 1
    %s672 = scalar_lea.sflag [#allocation3], 1
    %673 = vsyncpa %s672, 1
    %674 = vsyncpa [#allocation5], 1
    %s675 = scalar_lea.sflag [#allocation5], 1
    %676 = vsyncpa %s675, 1

</llo_original>
